<compile_context>
chip_gen: v5e
topology: v5e:2x2
jax: 0.10.0
libtpu: 0.0.40
codegen_flags: <defaults>
</compile_context>

<pallas_src>
import functools

import jax
import jax.numpy as jnp
from jax.experimental import pallas as pl
from jax.experimental.pallas import tpu as pltpu


def _make_divisible(ch, divisor=8, min_ch=None):
    if min_ch is None:
        min_ch = divisor
    new_ch = max(min_ch, int(ch + divisor / 2) // divisor * divisor)
    if new_ch < 0.9 * ch:
        new_ch += divisor
    return new_ch


# ----------------------------------------------------------------------------
# Kernels
# ----------------------------------------------------------------------------
def _scam_fused_kernel(x_ref, w1t_ref, b1_ref, w2t_ref, b2_ref, o_ref, *, inv_hw):
    # x_ref / o_ref: (nb, C, HWp)   w1t: (C, S)  b1: (1, S)  w2t: (S, C)  b2: (1, C)
    x = x_ref[...].astype(jnp.float32)
    pooled = jnp.sum(x, axis=-1) * inv_hw                                  # (nb, C)
    s1 = jnp.dot(pooled, w1t_ref[...],
                 preferred_element_type=jnp.float32) + b1_ref[...]         # (nb, S)
    s1 = jnp.maximum(s1, 0.0)
    s2 = jnp.dot(s1, w2t_ref[...],
                 preferred_element_type=jnp.float32) + b2_ref[...]         # (nb, C)
    scale = jnp.clip(s2 + 3.0, 0.0, 6.0) * (1.0 / 6.0)                     # hardsigmoid
    # f32 multiply, cast only at the store.
    o_ref[...] = (x * scale[:, :, None]).astype(o_ref.dtype)


def _scam_pool_scale_kernel(x_ref, w1t_ref, b1_ref, w2t_ref, b2_ref,
                            scale_ref, acc_ref, *, inv_hw):
    # Pass 1: batch-parallel, HW-tiled global-avg-pool + tiny scale computation.
    # x_ref: (nb, C, t_hw)   scale_ref: (nb, C, 1)   acc_ref: (nb, C) f32 scratch
    h = pl.program_id(1)

    @pl.when(h == 0)
    def _():
        acc_ref[...] = jnp.zeros_like(acc_ref)

    acc_ref[...] += jnp.sum(x_ref[...].astype(jnp.float32), axis=-1)

    @pl.when(h == pl.num_programs(1) - 1)
    def _():
        pooled = acc_ref[...] * inv_hw                                     # (nb, C)
        s1 = jnp.dot(pooled, w1t_ref[...],
                     preferred_element_type=jnp.float32) + b1_ref[...]
        s1 = jnp.maximum(s1, 0.0)
        s2 = jnp.dot(s1, w2t_ref[...],
                     preferred_element_type=jnp.float32) + b2_ref[...]
        scale = jnp.clip(s2 + 3.0, 0.0, 6.0) * (1.0 / 6.0)
        scale_ref[...] = scale[:, :, None].astype(scale_ref.dtype)


def _scam_apply_kernel(scale_ref, x_ref, o_ref):
    # Pass 2: lane-dense broadcast multiply (f32 math, cast at the store).
    # scale_ref: (nb, C, 1) f32   x_ref / o_ref: (nb, C, t_hw)
    o_ref[...] = (x_ref[...].astype(jnp.float32) * scale_ref[...]).astype(o_ref.dtype)


# ----------------------------------------------------------------------------
# Wrapper helpers
# ----------------------------------------------------------------------------
@functools.lru_cache(maxsize=None)
def _vmem_budgets():
    """(slab_budget_bytes, vmem_limit_cap_bytes) for this TPU generation."""
    vmem_cap_phys = 64 << 20   # conservative default (v7x)
    try:
        info = pltpu.get_tpu_info()
        for attr in ("vmem_capacity_bytes", "vmem_size_bytes", "vmem_bytes"):
            v = getattr(info, attr, None)
            if v:
                vmem_cap_phys = int(v)
                break
    except Exception:
        pass
    if vmem_cap_phys >= (96 << 20):      # v5e / v6e: 128 MiB physical VMEM
        return (6 << 20, 64 << 20)
    return (3 << 20, 40 << 20)           # v7x: 64 MiB physical VMEM


def _pick_batch_block(N, per_item_bytes, budget, min_steps=1):
    """Largest divisor nb of N with nb*per_item <= budget and N//nb >= min_steps."""
    fallback = 1
    for nb in range(N, 0, -1):
        if N % nb or nb * per_item_bytes > budget:
            continue
        if N // nb >= min_steps:
            return nb
        fallback = nb
    return fallback


# ----------------------------------------------------------------------------
# Wrapper
# ----------------------------------------------------------------------------
@functools.partial(jax.jit, static_argnames=("force_two_pass",))
def scam_forward(x, w1, b1, w2, b2, *, force_two_pass=False):
    N, C, H, W = x.shape
    S = w1.shape[0]
    HW = H * W
    itemsize = jnp.dtype(x.dtype).itemsize
    slab_budget, vmem_cap = _vmem_budgets()

    # Lane-dense spatial axis: zero-pad HW up to a multiple of 128 so every
    # store is unmasked.  inv_hw uses the true HW, so the pooled mean (hence
    # the channel scale) is unchanged; padded columns are sliced off at the end.
    HWp = ((HW + 127) // 128) * 128
    x3 = x.reshape(N, C, HW)
    if HWp != HW:
        x3 = jnp.pad(x3, ((0, 0), (0, 0), (0, HWp - HW)))
    inv_hw = 1.0 / HW

    # Row-form weights so the tiny matmuls are (nb,C)@(C,S) / (nb,S)@(S,C)
    # instead of degenerate (.,1)-shaped MXU ops.
    w1t = jnp.transpose(w1).astype(jnp.float32)          # (C, S)
    w2t = jnp.transpose(w2).astype(jnp.float32)          # (S, C)
    b1r = b1.reshape(1, S).astype(jnp.float32)
    b2r = b2.reshape(1, C).astype(jnp.float32)

    def clamp_vmem(nbytes):
        return int(min(max(nbytes, 8 << 20), vmem_cap))

    # Fused vs two-pass decided per item: the fused path already tiles over
    # batch, so the only constraint is that one (nb, C, HWp) slab fits.
    per_item = C * HWp * itemsize
    use_fused = (not force_two_pass) and (per_item <= slab_budget)

    if use_fused:
        # ---- single-pass fused path: 1 HBM read + 1 write of x -------------
        min_steps = 1 if N == 1 else (4 if N >= 8 else 2)
        nb = _pick_batch_block(N, per_item, slab_budget, min_steps)
        slab = nb * per_item
        kernel = functools.partial(_scam_fused_kernel, inv_hw=inv_hw)
        out3 = pl.pallas_call(
            kernel,
            out_shape=jax.ShapeDtypeStruct((N, C, HWp), x.dtype),
            grid_spec=pltpu.PrefetchScalarGridSpec(
                num_scalar_prefetch=0,
                grid=(N // nb,),
                in_specs=[
                    pl.BlockSpec((nb, C, HWp), lambda n: (n, 0, 0)),
                    pl.BlockSpec((C, S), lambda n: (0, 0)),
                    pl.BlockSpec((1, S), lambda n: (0, 0)),
                    pl.BlockSpec((S, C), lambda n: (0, 0)),
                    pl.BlockSpec((1, C), lambda n: (0, 0)),
                ],
                out_specs=pl.BlockSpec((nb, C, HWp), lambda n: (n, 0, 0)),
            ),
            compiler_params=pltpu.CompilerParams(
                dimension_semantics=("parallel",),
                vmem_limit_bytes=clamp_vmem(6 * slab + (2 << 20))),
        )(x3, w1t, b1r, w2t, b2r)
        if HWp != HW:
            out3 = out3[..., :HW]
        return out3.reshape(N, C, H, W)

    # ---- two-pass path: pooled-scale reduction, then broadcast multiply ----
    # Spatial tile: largest multiple-of-128 divisor of HWp whose single-item
    # slab fits the budget.
    m = HWp // 128
    t_hw = 128
    for d in range(m, 0, -1):
        if m % d == 0 and C * d * 128 * itemsize <= slab_budget:
            t_hw = d * 128
            break
    n_hw = HWp // t_hw
    per_item_t = C * t_hw * itemsize

    # Pass 1: batch-parallel (megacore), HW-tiled pooled sum; the (nb, C, 1)
    # channel scale is emitted on the last HW tile of each batch block.
    nb1 = _pick_batch_block(N, per_item_t, slab_budget,
                            min_steps=1 if N == 1 else 2)
    kernel1 = functools.partial(_scam_pool_scale_kernel, inv_hw=inv_hw)
    scale = pl.pallas_call(
        kernel1,
        out_shape=jax.ShapeDtypeStruct((N, C, 1), jnp.float32),
        grid_spec=pltpu.PrefetchScalarGridSpec(
            num_scalar_prefetch=0,
            grid=(N // nb1, n_hw),
            in_specs=[
                pl.BlockSpec((nb1, C, t_hw), lambda n, h: (n, 0, h)),
                pl.BlockSpec((C, S), lambda n, h: (0, 0)),
                pl.BlockSpec((1, S), lambda n, h: (0, 0)),
                pl.BlockSpec((S, C), lambda n, h: (0, 0)),
                pl.BlockSpec((1, C), lambda n, h: (0, 0)),
            ],
            out_specs=pl.BlockSpec((nb1, C, 1), lambda n, h: (n, 0, 0)),
            scratch_shapes=[pltpu.VMEM((nb1, C), jnp.float32)],
        ),
        compiler_params=pltpu.CompilerParams(
            dimension_semantics=("parallel", "arbitrary"),
            vmem_limit_bytes=clamp_vmem(4 * nb1 * per_item_t + (2 << 20))),
    )(x3, w1t, b1r, w2t, b2r)

    # Pass 2: lane-dense broadcast multiply, 2-D parallel grid (batch x HW).
    nb2 = _pick_batch_block(N, per_item_t, slab_budget,
                            min_steps=1 if (N == 1 or n_hw >= 2) else 2)
    out3 = pl.pallas_call(
        _scam_apply_kernel,
        out_shape=jax.ShapeDtypeStruct((N, C, HWp), x.dtype),
        grid_spec=pltpu.PrefetchScalarGridSpec(
            num_scalar_prefetch=0,
            grid=(N // nb2, n_hw),
            in_specs=[
                pl.BlockSpec((nb2, C, 1), lambda n, h: (n, 0, 0)),
                pl.BlockSpec((nb2, C, t_hw), lambda n, h: (n, 0, h)),
            ],
            out_specs=pl.BlockSpec((nb2, C, t_hw), lambda n, h: (n, 0, h)),
        ),
        compiler_params=pltpu.CompilerParams(
            dimension_semantics=("parallel", "parallel"),
            vmem_limit_bytes=clamp_vmem(6 * nb2 * per_item_t + (2 << 20))),
    )(scale, x3)
    if HWp != HW:
        out3 = out3[..., :HW]
    return out3.reshape(N, C, H, W)


# ----------------------------------------------------------------------------
# Pure-JAX reference of the PyTorch SCAM forward
# ----------------------------------------------------------------------------
def scam_reference(x, w1, b1, w2, b2):
    pooled = jnp.mean(x, axis=(2, 3), keepdims=True)                       # (N,C,1,1)
    s1 = jnp.einsum("sc,ncij->nsij", w1, pooled) + b1.reshape(1, -1, 1, 1)
    s1 = jax.nn.relu(s1)
    s2 = jnp.einsum("cs,nsij->ncij", w2, s1) + b2.reshape(1, -1, 1, 1)
    scale = jnp.clip(s2 + 3.0, 0.0, 6.0) / 6.0                             # hardsigmoid
    return scale * x


if __name__ == "__main__":
    # Module config: SCAM(input_c=16, squeeze_factor=4) -> squeeze_c = 8
    N, C, H, W = 2, 16, 16, 16
    squeeze_factor = 4
    S = _make_divisible(C // squeeze_factor, 8)   # = 8

    key = jax.random.PRNGKey(0)
    kx, kw1, kb1, kw2, kb2, kx2 = jax.random.split(key, 6)

    x = jax.random.normal(kx, (N, C, H, W), dtype=jnp.float32)
    w1 = 0.1 * jax.random.normal(kw1, (S, C), dtype=jnp.float32)   # fc1.weight (S,C,1,1)
    b1 = 0.1 * jax.random.normal(kb1, (S,), dtype=jnp.float32)     # fc1.bias
    w2 = 0.1 * jax.random.normal(kw2, (C, S), dtype=jnp.float32)   # fc2.weight (C,S,1,1)
    b2 = 0.1 * jax.random.normal(kb2, (C,), dtype=jnp.float32)     # fc2.bias

    ref = scam_reference(x, w1, b1, w2, b2)

    # Fused single-pass path (default when one item's (C, HW) slab fits VMEM).
    out_fused = jax.block_until_ready(scam_forward(x, w1, b1, w2, b2))
    assert out_fused.shape == (N, C, H, W)
    assert jnp.allclose(out_fused, ref, atol=1e-5, rtol=1e-5), "fused path mismatch"

    # Two-pass (batch-parallel pool+scale, then lane-dense apply) path.
    out_2p = jax.block_until_ready(
        scam_forward(x, w1, b1, w2, b2, force_two_pass=True))
    assert jnp.allclose(out_2p, ref, atol=1e-5, rtol=1e-5), "two-pass path mismatch"

    # Non-multiple-of-128 spatial size: wrapper zero-pads HW to 256 (lane-dense).
    x_odd = jax.random.normal(kx2, (N, C, 14, 14), dtype=jnp.float32)
    ref_odd = scam_reference(x_odd, w1, b1, w2, b2)
    out_odd_f = jax.block_until_ready(scam_forward(x_odd, w1, b1, w2, b2))
    assert jnp.allclose(out_odd_f, ref_odd, atol=1e-5, rtol=1e-5), "padded fused mismatch"
    out_odd_2p = jax.block_until_ready(
        scam_forward(x_odd, w1, b1, w2, b2, force_two_pass=True))
    assert jnp.allclose(out_odd_2p, ref_odd, atol=1e-5, rtol=1e-5), "padded two-pass mismatch"

    print("KERNEL_OK")
</pallas_src>

<mosaic_0001>
module attributes {stable_mosaic.version = 11 : i64} {
  func.func @_scam_fused_kernel(%arg0: i32, %arg1: memref<1x16x256xf32, #tpu.memory_space<vmem>>, %arg2: memref<16x8xf32, #tpu.memory_space<vmem>>, %arg3: memref<1x8xf32, #tpu.memory_space<vmem>>, %arg4: memref<8x16xf32, #tpu.memory_space<vmem>>, %arg5: memref<1x16xf32, #tpu.memory_space<vmem>>, %arg6: memref<1x16x256xf32, #tpu.memory_space<vmem>>) attributes {dimension_semantics = [#tpu.dimension_semantics<parallel>], iteration_bounds = array<i64: 2>, scalar_prefetch = 0 : i64, scratch_operands = 0 : i64, tpu.core_type = #tpu.core_type<tc>, window_params = [{transform_indices = @transform_0, window_bounds = array<i64: 1, 16, 256>}, {pipeline_mode = #tpu.pipeline_mode<synchronous>, transform_indices = @transform_1, window_bounds = array<i64: 16, 8>}, {pipeline_mode = #tpu.pipeline_mode<synchronous>, transform_indices = @transform_2, window_bounds = array<i64: 1, 8>}, {pipeline_mode = #tpu.pipeline_mode<synchronous>, transform_indices = @transform_3, window_bounds = array<i64: 8, 16>}, {pipeline_mode = #tpu.pipeline_mode<synchronous>, transform_indices = @transform_4, window_bounds = array<i64: 1, 16>}, {transform_indices = @transform_5, window_bounds = array<i64: 1, 16, 256>}]} {
    %c0 = arith.constant 0 : index
    %c0_0 = arith.constant 0 : index
    %c0_1 = arith.constant 0 : index
    %0 = vector.load %arg1[%c0, %c0_0, %c0_1] : memref<1x16x256xf32, #tpu.memory_space<vmem>>, vector<1x16x256xf32>
    %cst = arith.constant dense<0.000000e+00> : vector<1x16xf32>
    %1 = vector.multi_reduction <add>, %0, %cst [2] : vector<1x16x256xf32> to vector<1x16xf32>
    %cst_2 = arith.constant 3.906250e-03 : f32
    %2 = vector.broadcast %cst_2 : f32 to vector<1x16xf32>
    %3 = arith.mulf %1, %2 : vector<1x16xf32>
    %c0_3 = arith.constant 0 : index
    %c0_4 = arith.constant 0 : index
    %4 = vector.load %arg2[%c0_3, %c0_4] : memref<16x8xf32, #tpu.memory_space<vmem>>, vector<16x8xf32>
    %cst_5 = arith.constant dense<0.000000e+00> : vector<1x8xf32>
    %5 = tpu.matmul %3, %4, %cst_5 {dimension_numbers = #tpu.dot_dimension_numbers<[1], [0], [0], [1], [0, 0, 1, 1], [], []>} : vector<1x16xf32>, vector<16x8xf32>, vector<1x8xf32> -> vector<1x8xf32>
    %c0_6 = arith.constant 0 : index
    %c0_7 = arith.constant 0 : index
    %6 = vector.load %arg3[%c0_6, %c0_7] : memref<1x8xf32, #tpu.memory_space<vmem>>, vector<1x8xf32>
    %7 = arith.addf %5, %6 : vector<1x8xf32>
    %cst_8 = arith.constant 0.000000e+00 : f32
    %8 = vector.broadcast %cst_8 : f32 to vector<1x8xf32>
    %9 = arith.maximumf %7, %8 : vector<1x8xf32>
    %c0_9 = arith.constant 0 : index
    %c0_10 = arith.constant 0 : index
    %10 = vector.load %arg4[%c0_9, %c0_10] : memref<8x16xf32, #tpu.memory_space<vmem>>, vector<8x16xf32>
    %cst_11 = arith.constant dense<0.000000e+00> : vector<1x16xf32>
    %11 = tpu.matmul %9, %10, %cst_11 {dimension_numbers = #tpu.dot_dimension_numbers<[1], [0], [0], [1], [0, 0, 1, 1], [], []>} : vector<1x8xf32>, vector<8x16xf32>, vector<1x16xf32> -> vector<1x16xf32>
    %c0_12 = arith.constant 0 : index
    %c0_13 = arith.constant 0 : index
    %12 = vector.load %arg5[%c0_12, %c0_13] : memref<1x16xf32, #tpu.memory_space<vmem>>, vector<1x16xf32>
    %13 = arith.addf %11, %12 : vector<1x16xf32>
    %cst_14 = arith.constant 3.000000e+00 : f32
    %14 = vector.broadcast %cst_14 : f32 to vector<1x16xf32>
    %15 = arith.addf %13, %14 : vector<1x16xf32>
    %cst_15 = arith.constant 0.000000e+00 : f32
    %cst_16 = arith.constant 6.000000e+00 : f32
    %16 = vector.broadcast %cst_15 : f32 to vector<1x16xf32>
    %17 = arith.maximumf %16, %15 : vector<1x16xf32>
    %18 = vector.broadcast %cst_16 : f32 to vector<1x16xf32>
    %19 = arith.minimumf %18, %17 : vector<1x16xf32>
    %cst_17 = arith.constant 0.166666672 : f32
    %20 = vector.broadcast %cst_17 : f32 to vector<1x16xf32>
    %21 = arith.mulf %19, %20 : vector<1x16xf32>
    %22 = vector.shape_cast %21 : vector<1x16xf32> to vector<1x16x1xf32>
    %23 = vector.broadcast %22 : vector<1x16x1xf32> to vector<1x16x256xf32>
    %24 = arith.mulf %0, %23 : vector<1x16x256xf32>
    %c0_18 = arith.constant 0 : index
    %c0_19 = arith.constant 0 : index
    %c0_20 = arith.constant 0 : index
    %25 = vector.load %arg6[%c0_18, %c0_19, %c0_20] : memref<1x16x256xf32, #tpu.memory_space<vmem>>, vector<1x16x256xf32>
    tpu.vector_store %arg6[%c0_18, %c0_19, %c0_20], %24 {strides = array<i32>} : memref<1x16x256xf32, #tpu.memory_space<vmem>>, vector<1x16x256xf32>,
    return
  }
  func.func @transform_0(%arg0: i32) -> (i32, i32, i32) {
    %c0_i32 = arith.constant 0 : i32
    %c0_i32_0 = arith.constant 0 : i32
    %c0_i32_1 = arith.constant 0 : i32
    return %arg0, %c0_i32, %c0_i32_0 : i32, i32, i32
  }
  func.func @transform_1(%arg0: i32) -> (i32, i32) {
    %c0_i32 = arith.constant 0 : i32
    %c0_i32_0 = arith.constant 0 : i32
    %c0_i32_1 = arith.constant 0 : i32
    return %c0_i32, %c0_i32_0 : i32, i32
  }
  func.func @transform_2(%arg0: i32) -> (i32, i32) {
    %c0_i32 = arith.constant 0 : i32
    %c0_i32_0 = arith.constant 0 : i32
    %c0_i32_1 = arith.constant 0 : i32
    return %c0_i32, %c0_i32_0 : i32, i32
  }
  func.func @transform_3(%arg0: i32) -> (i32, i32) {
    %c0_i32 = arith.constant 0 : i32
    %c0_i32_0 = arith.constant 0 : i32
    %c0_i32_1 = arith.constant 0 : i32
    return %c0_i32, %c0_i32_0 : i32, i32
  }
  func.func @transform_4(%arg0: i32) -> (i32, i32) {
    %c0_i32 = arith.constant 0 : i32
    %c0_i32_0 = arith.constant 0 : i32
    %c0_i32_1 = arith.constant 0 : i32
    return %c0_i32, %c0_i32_0 : i32, i32
  }
  func.func @transform_5(%arg0: i32) -> (i32, i32, i32) {
    %c0_i32 = arith.constant 0 : i32
    %c0_i32_0 = arith.constant 0 : i32
    %c0_i32_1 = arith.constant 0 : i32
    return %arg0, %c0_i32, %c0_i32_0 : i32, i32, i32
  }
}

</mosaic_0001>

<llo_original>
// kernel: scam_forward.1
$region0: #{scam_forward.1}
  #allocation0 [shape = 'u32[]', space=smem, size = 0x4, offset = 0x4, fixed_abs, tag = 'smem constant byte address 0x4 - core index']
  #allocation1 [shape = 'u32[72,128]{1,0:T(1,128)}', space=vmem, size = 0x9000, scoped, tag = 'internal scratch']
  %s0 = inlined_call_operand.vmem [shape: f32[2,16,256], index: 0, kind: input, shape index: {}]
  %s1 = inlined_call_operand.vmem [shape: f32[16,8], index: 1, kind: input, shape index: {}]
  %s2 = inlined_call_operand.vmem [shape: f32[1,8], index: 2, kind: input, shape index: {}]
  %s3 = inlined_call_operand.vmem [shape: f32[8,16], index: 3, kind: input, shape index: {}]
  %s4 = inlined_call_operand.vmem [shape: f32[1,16], index: 4, kind: input, shape index: {}]
  %s5 = inlined_call_operand.vmem [shape: f32[2,16,256], index: 5, kind: output, shape index: {}]
  %s6 = sld [smem:[#allocation0]]
  $region53: #{scam_forward.1} parent=0
    _
  %s8 = ssub.s32 1, %s6
  %s9 = scalar_select 0, %s8, %s6
  loop: start=0, step=1, limit=4
  $region2: #{scam_forward.1} parent=0 // loop_pre_header
    _
  $region3: #{scam_forward.1} parent=0 // loop_header
    %s11 = sphi 0, %s15
    %p12 = scmp.ge.s32.totalorder %s11, 4
    %s21 = sphi 0, %s23
    %s24 = sphi 0, %s21
    %s25 = sphi 0, %s24
    %s41 = sphi 0, %s25
    %s45 = sphi 0, %s45
    %s47 = sphi 0, %s45
    %s48 = sphi 0, %s47
    %s62 = sphi 0, %s48
    %s66 = sphi 0, %s66
    %s68 = sphi 0, %s66
    %s69 = sphi 0, %s68
    %s83 = sphi 0, %s69
    %s87 = sphi 0, %s87
    %s89 = sphi 0, %s87
    %s90 = sphi 0, %s89
    %s104 = sphi 0, %s90
    %s108 = sphi 0, %s108
    %s110 = sphi 0, %s108
    %s111 = sphi 0, %s110
    %s125 = sphi 0, %s111
    %s131 = sphi 0, %s133
    %s134 = sphi 0, %s131
    %s135 = sphi 0, %s134
    %s151 = sphi 0, %s135
  $region4: #{scam_forward.1} parent=0 // loop_header_branch
    %14 = sbr.rel (%p12) target = $region8
  $region5: #{scam_forward.1} parent=0 // loop_body
    %s16 = ssub.s32 %s11, 1
    %s17 = ssub.s32 %s11, 2
    %s18 = sadd.s32 %s11, 1
    %s19 = ssub.s32 %s11, %s18
    %p20 = scmp.eq.s32.totalorder %s19, 0
    %s22 = sadd.s32 %s21, 1
    %s23 = scalar_select %p20, %s21, %s22
    %p26 = pneg %p20
    %p27 = scmp.eq.s32.totalorder %s11, 1
    %p28 = por %p26, %p27
    %p29 = scmp.ne.s32.totalorder %s21, %s24
    %p30 = scmp.eq.s32.totalorder %s11, 0
    %p31 = por %p29, %p30
    %p32 = scmp.ne.s32.totalorder %s21, %s24
    %p33 = scmp.eq.s32.totalorder %s16, 1
    %p34 = por %p32, %p33
    %p35 = scmp.ne.s32.totalorder %s24, %s25
    %p36 = scmp.eq.s32.totalorder %s16, 0
    %p37 = por %p35, %p36
    %p38 = scmp.ne.s32.totalorder %s24, %s25
    %p39 = scmp.eq.s32.totalorder %s17, 1
    %p40 = por %p38, %p39
    %p42 = scmp.ne.s32.totalorder %s25, %s41
    %p43 = scmp.eq.s32.totalorder %s17, 0
    %p44 = por %p42, %p43
    %s46 = sadd.s32 %s45, 1
    %p49 = scmp.eq.s32.totalorder %s11, 1
    %p50 = scmp.ne.s32.totalorder %s45, %s47
    %p51 = scmp.eq.s32.totalorder %s11, 0
    %p52 = por %p50, %p51
    %p53 = scmp.ne.s32.totalorder %s45, %s47
    %p54 = scmp.eq.s32.totalorder %s16, 1
    %p55 = por %p53, %p54
    %p56 = scmp.ne.s32.totalorder %s47, %s48
    %p57 = scmp.eq.s32.totalorder %s16, 0
    %p58 = por %p56, %p57
    %p59 = scmp.ne.s32.totalorder %s47, %s48
    %p60 = scmp.eq.s32.totalorder %s17, 1
    %p61 = por %p59, %p60
    %p63 = scmp.ne.s32.totalorder %s48, %s62
    %p64 = scmp.eq.s32.totalorder %s17, 0
    %p65 = por %p63, %p64
    %s67 = sadd.s32 %s66, 1
    %p70 = scmp.eq.s32.totalorder %s11, 1
    %p71 = scmp.ne.s32.totalorder %s66, %s68
    %p72 = scmp.eq.s32.totalorder %s11, 0
    %p73 = por %p71, %p72
    %p74 = scmp.ne.s32.totalorder %s66, %s68
    %p75 = scmp.eq.s32.totalorder %s16, 1
    %p76 = por %p74, %p75
    %p77 = scmp.ne.s32.totalorder %s68, %s69
    %p78 = scmp.eq.s32.totalorder %s16, 0
    %p79 = por %p77, %p78
    %p80 = scmp.ne.s32.totalorder %s68, %s69
    %p81 = scmp.eq.s32.totalorder %s17, 1
    %p82 = por %p80, %p81
    %p84 = scmp.ne.s32.totalorder %s69, %s83
    %p85 = scmp.eq.s32.totalorder %s17, 0
    %p86 = por %p84, %p85
    %s88 = sadd.s32 %s87, 1
    %p91 = scmp.eq.s32.totalorder %s11, 1
    %p92 = scmp.ne.s32.totalorder %s87, %s89
    %p93 = scmp.eq.s32.totalorder %s11, 0
    %p94 = por %p92, %p93
    %p95 = scmp.ne.s32.totalorder %s87, %s89
    %p96 = scmp.eq.s32.totalorder %s16, 1
    %p97 = por %p95, %p96
    %p98 = scmp.ne.s32.totalorder %s89, %s90
    %p99 = scmp.eq.s32.totalorder %s16, 0
    %p100 = por %p98, %p99
    %p101 = scmp.ne.s32.totalorder %s89, %s90
    %p102 = scmp.eq.s32.totalorder %s17, 1
    %p103 = por %p101, %p102
    %p105 = scmp.ne.s32.totalorder %s90, %s104
    %p106 = scmp.eq.s32.totalorder %s17, 0
    %p107 = por %p105, %p106
    %s109 = sadd.s32 %s108, 1
    %p112 = scmp.eq.s32.totalorder %s11, 1
    %p113 = scmp.ne.s32.totalorder %s108, %s110
    %p114 = scmp.eq.s32.totalorder %s11, 0
    %p115 = por %p113, %p114
    %p116 = scmp.ne.s32.totalorder %s108, %s110
    %p117 = scmp.eq.s32.totalorder %s16, 1
    %p118 = por %p116, %p117
    %p119 = scmp.ne.s32.totalorder %s110, %s111
    %p120 = scmp.eq.s32.totalorder %s16, 0
    %p121 = por %p119, %p120
    %p122 = scmp.ne.s32.totalorder %s110, %s111
    %p123 = scmp.eq.s32.totalorder %s17, 1
    %p124 = por %p122, %p123
    %p126 = scmp.ne.s32.totalorder %s111, %s125
    %p127 = scmp.eq.s32.totalorder %s17, 0
    %p128 = por %p126, %p127
    %s129 = ssub.s32 %s11, %s18
    %p130 = scmp.eq.s32.totalorder %s129, 0
    %s132 = sadd.s32 %s131, 1
    %s133 = scalar_select %p130, %s131, %s132
    %p136 = pneg %p130
    %p137 = scmp.eq.s32.totalorder %s11, 1
    %p138 = por %p136, %p137
    %p139 = scmp.ne.s32.totalorder %s131, %s134
    %p140 = scmp.eq.s32.totalorder %s11, 0
    %p141 = por %p139, %p140
    %p142 = scmp.ne.s32.totalorder %s131, %s134
    %p143 = scmp.eq.s32.totalorder %s16, 1
    %p144 = por %p142, %p143
    %p145 = scmp.ne.s32.totalorder %s134, %s135
    %p146 = scmp.eq.s32.totalorder %s16, 0
    %p147 = por %p145, %p146
    %p148 = scmp.ne.s32.totalorder %s134, %s135
    %p149 = scmp.eq.s32.totalorder %s17, 1
    %p150 = por %p148, %p149
    %p152 = scmp.ne.s32.totalorder %s135, %s151
    %p153 = scmp.eq.s32.totalorder %s17, 0
    %p154 = por %p152, %p153
    %p155 = scmp.le.s32.totalorder 1, %s11
    %p156 = scmp.lt.s32.totalorder %s11, 3
    %p157 = pnand %p155, %p156
    %p158 = pneg %p157
    // Predicated region
    $region9: #{scam_forward.1} parent=5 // pred_check
      _
    $region10: #{scam_forward.1} parent=5 // pred_check_branch
      %160 = sbr.rel (%p157) target = $region12
    $region11: #{scam_forward.1} parent=5 // pred_region
      %s161 = ssub.s32 %s11, 1
      // Predicated region
      $region13: #{scam_forward.1} parent=11 // pred_check
        %p162 = pneg %p58
      $region14: #{scam_forward.1} parent=11 // pred_check_branch
        %164 = sbr.rel (%p162) target = $region16
      $region15: #{scam_forward.1} parent=11 // pred_region
        _
      $region16: #{scam_forward.1} parent=11 // pred_fallthru
        _
      // Predicated region
      $region17: #{scam_forward.1} parent=11 // pred_check
        %p165 = pneg %p79
      $region18: #{scam_forward.1} parent=11 // pred_check_branch
        %167 = sbr.rel (%p165) target = $region20
      $region19: #{scam_forward.1} parent=11 // pred_region
        _
      $region20: #{scam_forward.1} parent=11 // pred_fallthru
        _
      // Predicated region
      $region21: #{scam_forward.1} parent=11 // pred_check
        %p168 = pneg %p100
      $region22: #{scam_forward.1} parent=11 // pred_check_branch
        %170 = sbr.rel (%p168) target = $region24
      $region23: #{scam_forward.1} parent=11 // pred_region
        _
      $region24: #{scam_forward.1} parent=11 // pred_fallthru
        _
      // Predicated region
      $region25: #{scam_forward.1} parent=11 // pred_check
        %p171 = pneg %p121
      $region26: #{scam_forward.1} parent=11 // pred_check_branch
        %173 = sbr.rel (%p171) target = $region28
      $region27: #{scam_forward.1} parent=11 // pred_region
        _
      $region28: #{scam_forward.1} parent=11 // pred_fallthru
        _
    $region12: #{scam_forward.1} parent=5 // pred_fallthru
      _
    %p174 = scmp.lt.s32.totalorder %s11, 2
    // Predicated region
    $region29: #{scam_forward.1} parent=5 // pred_check
      %p175 = pneg %p174
    $region30: #{scam_forward.1} parent=5 // pred_check_branch
      %177 = sbr.rel (%p175) target = $region32
    $region31: #{scam_forward.1} parent=5 // pred_region
      // Predicated region
      $region33: #{scam_forward.1} parent=31 // pred_check
        %p178 = pneg %p31
      $region34: #{scam_forward.1} parent=31 // pred_check_branch
        %180 = sbr.rel (%p178) target = $region36
      $region35: #{scam_forward.1} parent=31 // pred_region
        %p181 = scmp.lt.s32.totalorder %s11, 1
        %s182 = scalar_select %p181, %s11, 1
        %s183 = smul.addr %s182, 4
        %s184 = smul.addr %s183, 8
        %s185 = scalar_lea.vmem %s0, %s184
      $region36: #{scam_forward.1} parent=31 // pred_fallthru
        _
    $region32: #{scam_forward.1} parent=5 // pred_fallthru
      _
    %p186 = scmp.le.s32.totalorder 1, %s11
    %p187 = scmp.lt.s32.totalorder %s11, 3
    %p188 = pnand %p186, %p187
    %p189 = pneg %p188
    // Predicated region
    $region37: #{scam_forward.1} parent=5 // pred_check
      _
    $region38: #{scam_forward.1} parent=5 // pred_check_branch
      %191 = sbr.rel (%p188) target = $region40
    $region39: #{scam_forward.1} parent=5 // pred_region
      %s192 = ssub.s32 %s11, 1
      %p193 = scmp.lt.s32.totalorder %s16, 1
      %s194 = scalar_select %p193, %s16, 1
      %s195 = smul.addr %s194, 4
      %s196 = smul.addr %s195, 8
      %s197 = scalar_lea.vmem %s0, %s196
      %p198 = pneg %p37
      %p199 = pneg %p34
      %p200 = pneg %p58
      %p201 = pneg %p55
      %p202 = pneg %p79
      %p203 = pneg %p76
      %p204 = pneg %p100
      %p205 = pneg %p97
      %p206 = pneg %p121
      %p207 = pneg %p118
      %p208 = pneg %p147
      %p209 = pneg %p144
      %p210 = scmp.lt.s32.totalorder %s16, 1
      %s211 = scalar_select %p210, %s16, 1
      %s212 = smul.addr %s211, 4
      %s213 = smul.addr %s212, 8
      %s214 = scalar_lea.vmem %s5, %s213
      %p215 = scmp.lt.s32.totalorder %s16, 1
      %s216 = scalar_select %p215, %s16, 1
      %s217 = smul.addr %s216, 4
      %s218 = smul.addr %s217, 8
      %s219 = scalar_lea.vmem %s0, %s218
      %p220 = scmp.lt.s32.totalorder %s16, 1
      %s221 = scalar_select %p220, %s16, 1
      %s222 = smul.addr %s221, 4
      %s223 = smul.addr %s222, 8
      %s224 = scalar_lea.vmem %s5, %s223
      %v225 = vld [vmem:[%s219] sm:$0xff]
      %v226 = vld [vmem:[%s219 + $0x8] sm:$0xff]
      %v227 = vld [vmem:[%s219 + $0x10] sm:$0xff]
      %v228 = vld [vmem:[%s219 + $0x18] sm:$0xff]
      %v229 = vadd.f32 %v225, %v226
      %230 = vadd.xlane.f32.xlu0 %v229
      %v231 = vpop.xlane.xlu0 %230
      %v232 = vadd.f32 %v227, %v228
      %233 = vadd.xlane.f32.xlu0 %v232
      %v234 = vpop.xlane.xlu0 %233
      %v235 = vmul.f32 %v231, 0.00390625
      %v236 = vmul.f32 %v234, 0.00390625
      %v237 = vld [vmem:[%s1] sm:$0xff]
      %v238 = vld [vmem:[%s1 + $0x8] sm:$0xff]
      %v239 = vld [vmem:[%s2] sm:$0x1]
      %v242 = vlaneseq
      %v243 = vand.u32 %v242, 127
      %v244 = vperm.slane %v235, %v243
      %v245 = vadd.s32 %v243, 4294967288
      %v246 = vperm.slane %v236, %v245
      %vm247 = vcmask 130112
      %v248 = vsel %vm247, %v246, %v244
      %vm249 = vcmask 130048
      %v250 = vsel %vm249, %v248, 0
      %252 = vmatpush.msra.mxu0 0.0
      %253 = vmatpush.msra.mxu0 0.0
      %254 = vmatpush.msra.mxu0 0.0
      %255 = vmatpush.msra.mxu0 0.0
      %256 = vmatpush.msra.mxu0 0.0
      %257 = vmatpush.msra.mxu0 0.0
      %258 = vmatpush.msra.mxu0 0.0
      %259 = vmatpush.msra.mxu0 0.0
      %260 = vmatpush.msra.mxu0 0.0
      %261 = vmatpush.msra.mxu0 0.0
      %262 = vmatpush.msra.mxu0 0.0
      %263 = vmatpush.msra.mxu0 0.0
      %264 = vmatpush.msra.mxu0 0.0
      %265 = vmatpush.msra.mxu0 0.0
      %266 = vmatpush.msra.mxu0 %v238
      %267 = vmatpush.msra.mxu0 %v237
      %268 = vmatmul.f32.gmra.mxu0 %v250
      %v269 = vpop.f32.mrf.mxu0
      %v270 = vadd.f32 %v239, %v269
      %271 = vdwg.mxu0
      %v272 = vmax.f32 %v270, 0.0
      %v273 = vld [vmem:[%s3] sm:$0xff]
      %v274 = vld [vmem:[%s4] sm:$0x1]
      %vm275 = vcmask 64512
      %v277 = vsel %vm275, %v272, 0
      %279 = vmatpush.msra.mxu0 0.0
      %280 = vmatpush.msra.mxu0 0.0
      %281 = vmatpush.msra.mxu0 0.0
      %282 = vmatpush.msra.mxu0 0.0
      %283 = vmatpush.msra.mxu0 0.0
      %284 = vmatpush.msra.mxu0 0.0
      %285 = vmatpush.msra.mxu0 0.0
      %286 = vmatpush.msra.mxu0 0.0
      %287 = vmatpush.msra.mxu0 0.0
      %288 = vmatpush.msra.mxu0 0.0
      %289 = vmatpush.msra.mxu0 0.0
      %290 = vmatpush.msra.mxu0 0.0
      %291 = vmatpush.msra.mxu0 0.0
      %292 = vmatpush.msra.mxu0 0.0
      %293 = vmatpush.msra.mxu0 0.0
      %294 = vmatpush.msra.mxu0 %v273
      %295 = vmatmul.f32.gmra.mxu0 %v277
      %v296 = vpop.f32.mrf.mxu0
      %v297 = vadd.f32 %v274, %v296
      %298 = vdwg.mxu0
      %v299 = vadd.f32 %v297, 3.0
      %v300 = vmax.f32 %v299, 0.0
      %v301 = vmin.f32 %v300, 6.0
      %v302 = vmul.f32 %v301, 0.16666667
      %v303 = vperm.slane %v302, 0
      %v304 = vlaneseq
      %v305 = vshrl.u32 %v304, 7
      %307 = vset.pattern.permute.xlu0 %v305
      %308 = vperm.xlu0 %307, %v303
      %v309 = vpop.permute.xlu0 %308
      %v310 = vlaneseq
      %v311 = vshrl.u32 %v310, 7
      %v312 = vadd.s32 %v311, 8
      %313 = vset.pattern.permute.xlu0 %v312
      %314 = vperm.xlu0 %313, %v303
      %v315 = vpop.permute.xlu0 %314
      %v316 = vmul.f32 %v225, %v309
      %v317 = vmul.f32 %v226, %v309
      %v318 = vmul.f32 %v227, %v315
      %v319 = vmul.f32 %v228, %v315
      %320 = vst [vmem:[%s224] sm:$0xff] %v316
      %321 = vst [vmem:[%s224 + $0x8] sm:$0xff] %v317
      %322 = vst [vmem:[%s224 + $0x10] sm:$0xff] %v318
      %323 = vst [vmem:[%s224 + $0x18] sm:$0xff] %v319
      %p324 = scmp.lt.s32.totalorder %s16, 1
      %s325 = scalar_select %p324, %s16, 1
      %s326 = smul.addr %s325, 4
      %s327 = smul.addr %s326, 8
      %s328 = scalar_lea.vmem %s5, %s327
      // Predicated region
      $region41: #{scam_forward.1} parent=39 // pred_check
        %p329 = pneg %p144
      $region42: #{scam_forward.1} parent=39 // pred_check_branch
        %331 = sbr.rel (%p329) target = $region44
      $region43: #{scam_forward.1} parent=39 // pred_region
        _
      $region44: #{scam_forward.1} parent=39 // pred_fallthru
        _
    $region40: #{scam_forward.1} parent=5 // pred_fallthru
      _
    %p332 = scmp.le.s32.totalorder 2, %s11
    // Predicated region
    $region45: #{scam_forward.1} parent=5 // pred_check
      %p333 = pneg %p332
    $region46: #{scam_forward.1} parent=5 // pred_check_branch
      %335 = sbr.rel (%p333) target = $region48
    $region47: #{scam_forward.1} parent=5 // pred_region
      %s336 = ssub.s32 %s11, 2
      // Predicated region
      $region49: #{scam_forward.1} parent=47 // pred_check
        %p337 = pneg %p150
      $region50: #{scam_forward.1} parent=47 // pred_check_branch
        %339 = sbr.rel (%p337) target = $region52
      $region51: #{scam_forward.1} parent=47 // pred_region
        %p340 = scmp.lt.s32.totalorder %s17, 1
        %s341 = scalar_select %p340, %s17, 1
        %s342 = smul.addr %s341, 4
        %s343 = smul.addr %s342, 8
        %s344 = scalar_lea.vmem %s5, %s343
      $region52: #{scam_forward.1} parent=47 // pred_fallthru
        _
    $region48: #{scam_forward.1} parent=5 // pred_fallthru
      _
  $region6: #{scam_forward.1} parent=0 // loop_footer
    %s15 = sadd.s32 1, %s11
  $region7: #{scam_forward.1} parent=0 // loop_footer_branch
    %10 = sbr.rel target = $region3
  $region8: #{scam_forward.1} parent=0 // loop_exit
    _

</llo_original>
